<compile_context>
chip_gen: v5e
topology: v5e:2x2
jax: 0.10.0
libtpu: 0.0.40
codegen_flags: <defaults>
</compile_context>

<pallas_src>
import functools

import jax
import jax.numpy as jnp
from jax.experimental import pallas as pl
from jax.experimental.pallas import tpu as pltpu

_SUBLANE = 8
_PALLAS_MIN_BYTES = 2 * 1024 * 1024       # below this, XLA concat is faster / fusable
_MAX_BUDGET_BYTES = 32 * 1024 * 1024      # cap for the block VMEM budget


def _round_up(x, m):
    return (x + m - 1) // m * m


def _vmem_budget_bytes():
    """Block VMEM budget derived from the actual chip (v7x has only 64 MiB)."""
    cap = 64 * 1024 * 1024  # assume the smallest (v7x per-TC VMEM) if query fails
    try:
        info = pltpu.get_tpu_info()
        cap = int(getattr(info, "vmem_capacity_bytes", cap))
    except Exception:
        pass
    return min(_MAX_BUDGET_BYTES, (3 * cap) // 8)


def _choose_batch_tile(batch, total, itemsize, budget):
    """Batch-tile rows: big enough for HBM roofline, balanced across v7x's 2 TCs."""
    # Per grid step (double-buffered): inputs (total cols) + output (total cols).
    bytes_per_row = 4 * total * itemsize
    tb = budget // max(1, bytes_per_row)
    tb = min(max(tb, _SUBLANE), batch)
    # v7x megacore: give both TensorCores roughly equal work (>=2 equal-ish steps;
    # 4 steps once the batch is large enough that each step still has >=512 rows).
    if batch >= 2 * _SUBLANE:
        target_steps = 4 if batch >= 4 * 512 else 2
        tb = min(tb, _round_up(pl.cdiv(batch, target_steps), _SUBLANE))
    if tb < batch:
        tb = max(_SUBLANE, (tb // _SUBLANE) * _SUBLANE)
    return tb


def _concat_kernel(offsets, sizes, *refs):
    """Copies each input block into its static column window of the output block.

    refs = (*in_refs, out_ref); offsets/sizes are static Python ints. The dtype
    cast happens here (free VALU work, hidden under the HBM DMA).
    """
    out_ref = refs[-1]
    in_refs = refs[:-1]
    for ref, off, size in zip(in_refs, offsets, sizes):
        out_ref[:, off:off + size] = ref[...].astype(out_ref.dtype)


def concat_weights(x, start_dim=1, min_pallas_bytes=_PALLAS_MIN_BYTES):
    """JAX/Pallas equivalent of ConcatWeights.forward(x, start_dim=1)."""
    if start_dim != 1:
        raise NotImplementedError("only start_dim=1 (the module default) is supported")
    weights, biases = x
    tensors = list(weights) + list(biases)
    if not tensors:
        raise ValueError("ConcatWeights needs at least one tensor")

    batch = int(tensors[0].shape[0])
    for t in tensors:
        if int(t.shape[0]) != batch:
            raise ValueError(
                f"all tensors must share the leading batch dim {batch}; got {t.shape}")

    # torch.concat type-promotes mixed dtypes; mirror that (cast happens in-kernel).
    out_dtype = jnp.result_type(*tensors)
    out_itemsize = jnp.dtype(out_dtype).itemsize

    # Flatten everything after the batch dim (row-major, matching
    # torch.flatten(start_dim=1)). Reshape of a contiguous array is free.
    flats = [jnp.asarray(t).reshape(t.shape[0], -1) for t in tensors]
    sizes = tuple(int(f.shape[1]) for f in flats)
    total = sum(sizes)
    offsets = []
    acc = 0
    for s in sizes:
        offsets.append(acc)
        acc += s
    offsets = tuple(offsets)

    bytes_read = sum(batch * s * jnp.dtype(f.dtype).itemsize
                     for s, f in zip(sizes, flats))
    bytes_written = batch * total * out_itemsize

    # Small payload: XLA concatenate is at the same roofline and can often fuse
    # into the consumer; pallas_call launch + prologue would dominate here.
    if bytes_written < min_pallas_bytes:
        return jnp.concatenate([f.astype(out_dtype) for f in flats], axis=-1)

    budget = _vmem_budget_bytes()

    # Ultra-wide concat: even an 8-row tile of the full width would blow VMEM.
    # Degrade gracefully to XLA instead of failing to compile.
    if 4 * _SUBLANE * total * out_itemsize > budget:
        return jnp.concatenate([f.astype(out_dtype) for f in flats], axis=-1)

    tb = _choose_batch_tile(batch, total, out_itemsize, budget)
    grid = (pl.cdiv(batch, tb),)

    kernel = functools.partial(_concat_kernel, offsets, sizes)

    # Explicit vmem_limit: budget + headroom, always well under v7x's 64 MiB.
    vmem_limit = int(min(budget + 8 * 1024 * 1024, 48 * 1024 * 1024))

    return pl.pallas_call(
        kernel,
        out_shape=jax.ShapeDtypeStruct((batch, total), out_dtype),
        grid=grid,
        in_specs=[pl.BlockSpec((tb, s), lambda b: (b, 0)) for s in sizes],
        out_specs=pl.BlockSpec((tb, total), lambda b: (b, 0)),
        compiler_params=pltpu.CompilerParams(
            # Batch axis is embarrassingly parallel -> megacore (v7x: 2 TCs).
            dimension_semantics=("parallel",),
            vmem_limit_bytes=vmem_limit,
        ),
        cost_estimate=pl.CostEstimate(
            flops=0,
            transcendentals=0,
            bytes_accessed=int(bytes_read + bytes_written),
        ),
    )(*flats)


def concat_weights_ref(x):
    """Pure-JAX reference mirroring the PyTorch module."""
    weights, biases = x
    W = jnp.concatenate([w.reshape(w.shape[0], -1) for w in weights], axis=-1)
    if len(biases) > 0:
        B = jnp.concatenate([b.reshape(b.shape[0], -1) for b in biases], axis=-1)
        return jnp.concatenate([W, B], axis=-1)
    return W


if __name__ == "__main__":
    key = jax.random.PRNGKey(0)
    k1, k2, k3, k4 = jax.random.split(key, 4)

    # Per-example network weights/biases (neural-bandit meta setting):
    #   layer 0: weight (32, 16), bias (32,)
    #   layer 1: weight (16, 32), bias (16,)
    batch = 8
    weights = [
        jax.random.normal(k1, (batch, 32, 16), dtype=jnp.float32),
        jax.random.normal(k2, (batch, 16, 32), dtype=jnp.float32),
    ]
    biases = [
        jax.random.normal(k3, (batch, 32), dtype=jnp.float32),
        jax.random.normal(k4, (batch, 16), dtype=jnp.float32),
    ]
    x = (weights, biases)

    # 1) Small case, forced onto the Pallas path (payload below the 2 MiB default).
    out = jax.block_until_ready(concat_weights(x, min_pallas_bytes=0))
    expected = concat_weights_ref(x)
    assert out.shape == expected.shape, (out.shape, expected.shape)
    assert jnp.array_equal(out, expected), "mismatch vs reference (with biases)"

    # 2) Empty-biases branch (also forced Pallas path).
    out_nb = jax.block_until_ready(concat_weights((weights, []), min_pallas_bytes=0))
    assert jnp.array_equal(out_nb, concat_weights_ref((weights, [])))

    # 3) Multi-step, balanced batch grid with a partial final block
    #    (payload > 2 MiB -> natural Pallas path; grid splits ~272/258 rows).
    kb = jax.random.split(jax.random.PRNGKey(1), 4)
    big_batch = 530
    big_x = (
        [jax.random.normal(kb[0], (big_batch, 32, 16), dtype=jnp.float32),
         jax.random.normal(kb[1], (big_batch, 16, 32), dtype=jnp.float32)],
        [jax.random.normal(kb[2], (big_batch, 32), dtype=jnp.float32),
         jax.random.normal(kb[3], (big_batch, 16), dtype=jnp.float32)],
    )
    out_big = jax.block_until_ready(concat_weights(big_x))
    assert jnp.array_equal(out_big, concat_weights_ref(big_x))

    # 4) Mixed dtypes: the promotion/cast happens inside the kernel.
    mixed = ([w.astype(jnp.bfloat16) for w in weights], biases)
    out_mix = jax.block_until_ready(concat_weights(mixed, min_pallas_bytes=0))
    exp_mix = concat_weights_ref(mixed)
    assert out_mix.dtype == exp_mix.dtype
    assert jnp.array_equal(out_mix, exp_mix)

    # 5) Tiny payload takes the XLA-concatenate fast path by default.
    tiny = ([w[:2] for w in weights], [b[:2] for b in biases])
    out_tiny = jax.block_until_ready(concat_weights(tiny))
    assert jnp.array_equal(out_tiny, concat_weights_ref(tiny))

    print("KERNEL_OK")
</pallas_src>

<mosaic_0001>
module attributes {stable_mosaic.version = 11 : i64} {
  func.func @_concat_kernel(%arg0: i32, %arg1: memref<8x512xf32, #tpu.memory_space<vmem>>, %arg2: memref<8x512xf32, #tpu.memory_space<vmem>>, %arg3: memref<8x32xf32, #tpu.memory_space<vmem>>, %arg4: memref<8x16xf32, #tpu.memory_space<vmem>>, %arg5: memref<8x1072xf32, #tpu.memory_space<vmem>>) attributes {dimension_semantics = [#tpu.dimension_semantics<parallel>], iteration_bounds = array<i64: 1>, scalar_prefetch = 0 : i64, scratch_operands = 0 : i64, tpu.core_type = #tpu.core_type<tc>, window_params = [{transform_indices = @transform_0, window_bounds = array<i64: 8, 512>}, {transform_indices = @transform_1, window_bounds = array<i64: 8, 512>}, {transform_indices = @transform_2, window_bounds = array<i64: 8, 32>}, {transform_indices = @transform_3, window_bounds = array<i64: 8, 16>}, {transform_indices = @transform_4, window_bounds = array<i64: 8, 1072>}]} {
    %c0 = arith.constant 0 : index
    %c0_0 = arith.constant 0 : index
    %0 = vector.load %arg1[%c0, %c0_0] : memref<8x512xf32, #tpu.memory_space<vmem>>, vector<8x512xf32>
    %c0_1 = arith.constant 0 : index
    %c0_2 = arith.constant 0 : index
    %1 = vector.load %arg5[%c0_1, %c0_2] : memref<8x1072xf32, #tpu.memory_space<vmem>>, vector<8x512xf32>
    tpu.vector_store %arg5[%c0_1, %c0_2], %0 {strides = array<i32>} : memref<8x1072xf32, #tpu.memory_space<vmem>>, vector<8x512xf32>,
    %c0_3 = arith.constant 0 : index
    %c0_4 = arith.constant 0 : index
    %2 = vector.load %arg2[%c0_3, %c0_4] : memref<8x512xf32, #tpu.memory_space<vmem>>, vector<8x512xf32>
    %c0_5 = arith.constant 0 : index
    %c512 = arith.constant 512 : index
    %3 = vector.load %arg5[%c0_5, %c512] : memref<8x1072xf32, #tpu.memory_space<vmem>>, vector<8x512xf32>
    tpu.vector_store %arg5[%c0_5, %c512], %2 {strides = array<i32>} : memref<8x1072xf32, #tpu.memory_space<vmem>>, vector<8x512xf32>,
    %c0_6 = arith.constant 0 : index
    %c0_7 = arith.constant 0 : index
    %4 = vector.load %arg3[%c0_6, %c0_7] : memref<8x32xf32, #tpu.memory_space<vmem>>, vector<8x32xf32>
    %c0_8 = arith.constant 0 : index
    %c1024 = arith.constant 1024 : index
    %5 = vector.load %arg5[%c0_8, %c1024] : memref<8x1072xf32, #tpu.memory_space<vmem>>, vector<8x32xf32>
    tpu.vector_store %arg5[%c0_8, %c1024], %4 {strides = array<i32>} : memref<8x1072xf32, #tpu.memory_space<vmem>>, vector<8x32xf32>,
    %c0_9 = arith.constant 0 : index
    %c0_10 = arith.constant 0 : index
    %6 = vector.load %arg4[%c0_9, %c0_10] : memref<8x16xf32, #tpu.memory_space<vmem>>, vector<8x16xf32>
    %c0_11 = arith.constant 0 : index
    %c1056 = arith.constant 1056 : index
    %7 = vector.load %arg5[%c0_11, %c1056] : memref<8x1072xf32, #tpu.memory_space<vmem>>, vector<8x16xf32>
    tpu.vector_store %arg5[%c0_11, %c1056], %6 {strides = array<i32>} : memref<8x1072xf32, #tpu.memory_space<vmem>>, vector<8x16xf32>,
    return
  }
  func.func @transform_0(%arg0: i32) -> (i32, i32) {
    %c0_i32 = arith.constant 0 : i32
    %c0_i32_0 = arith.constant 0 : i32
    return %arg0, %c0_i32 : i32, i32
  }
  func.func @transform_1(%arg0: i32) -> (i32, i32) {
    %c0_i32 = arith.constant 0 : i32
    %c0_i32_0 = arith.constant 0 : i32
    return %arg0, %c0_i32 : i32, i32
  }
  func.func @transform_2(%arg0: i32) -> (i32, i32) {
    %c0_i32 = arith.constant 0 : i32
    %c0_i32_0 = arith.constant 0 : i32
    return %arg0, %c0_i32 : i32, i32
  }
  func.func @transform_3(%arg0: i32) -> (i32, i32) {
    %c0_i32 = arith.constant 0 : i32
    %c0_i32_0 = arith.constant 0 : i32
    return %arg0, %c0_i32 : i32, i32
  }
  func.func @transform_4(%arg0: i32) -> (i32, i32) {
    %c0_i32 = arith.constant 0 : i32
    %c0_i32_0 = arith.constant 0 : i32
    return %arg0, %c0_i32 : i32, i32
  }
}

</mosaic_0001>

<llo_original>
// kernel: tpu_custom_call.1
$region0: #{tpu_custom_call.1}
  #allocation0 [shape = 'u32[]', space=smem, size = 0x4, offset = 0x4, fixed_abs, tag = 'smem constant byte address 0x4 - core index']
  #allocation1 [shape = 'u32[72,128]{1,0:T(1,128)}', space=vmem, size = 0x9000, scoped, tag = 'internal scratch']
  %s0 = inlined_call_operand.hbm [shape: f32[8,512], index: 0, kind: input, shape index: {}]
  %s1 = inlined_call_operand.hbm [shape: f32[8,512], index: 1, kind: input, shape index: {}]
  %s2 = inlined_call_operand.hbm [shape: f32[8,32], index: 2, kind: input, shape index: {}]
  %s3 = inlined_call_operand.hbm [shape: f32[8,16], index: 3, kind: input, shape index: {}]
  %s4 = inlined_call_operand.hbm [shape: f32[8,1072], index: 4, kind: output, shape index: {}]
  %s5 = sld [smem:[#allocation0]]
  $region42: #{tpu_custom_call.1} parent=0
    _
  %s7 = ssub.s32 1, %s5
  %s8 = scalar_select 0, %s7, %s5
  $region1: #{tpu_custom_call.1} parent=0
    #allocation2 [shape = 'u8[16384]{0}', space=vmem, size = 0x4000, scoped, tag = 'input window, operand 0, single buffered']
    #allocation3 [shape = 's32[1]{0}', space=sflag, size = 0x4, scoped, tag = 'scoped memory for tpu_custom_call.1']
    #allocation4 [shape = 's32[1]{0}', space=sflag, size = 0x4, scoped, tag = 'scoped memory for tpu_custom_call.1']
    #allocation5 [shape = 'u8[16384]{0}', space=vmem, size = 0x4000, scoped, tag = 'input window, operand 1, single buffered']
    #allocation6 [shape = 's32[1]{0}', space=sflag, size = 0x4, scoped, tag = 'scoped memory for tpu_custom_call.1']
    #allocation7 [shape = 'u8[4096]{0}', space=vmem, size = 0x1000, scoped, tag = 'input window, operand 2, single buffered']
    #allocation8 [shape = 'u8[4096]{0}', space=vmem, size = 0x1000, scoped, tag = 'input window, operand 3, single buffered']
    #allocation9 [shape = 's32[1]{0}', space=sflag, size = 0x4, scoped, tag = 'scoped memory for tpu_custom_call.1']
    #allocation10 [shape = 'u8[36864]{0}', space=vmem, size = 0x9000, scoped, tag = 'output window, operand 0, single buffered']
    %9 = vsyncpa [#allocation3], 0
    %10 = vsyncpa [#allocation6], 0
    %11 = vsyncpa [#allocation9], 0
    %12 = vsyncpa [#allocation4], 0
    // Predicated region
    $region2: #{tpu_custom_call.1} parent=1 // pred_check
      _
    $region3: #{tpu_custom_call.1} parent=1 // pred_check_branch
      %14 = sbr.rel (0) target = $region5
    $region4: #{tpu_custom_call.1} parent=1 // pred_region
      %16 = vsyncadd [#allocation3], 0
      %s18 = sshll.u32 %s0, 4
      %s19 = int_to_ptr.hbm [resolvable:$true] %s18
      %s20 = sshll.u32 [#allocation2], 4
      %s21 = int_to_ptr.vmem [resolvable:$true] %s20
      %23 = dma.hbm_to_vmem [thread:$0]  %s19, 512, %s21, [#allocation3]
    $region5: #{tpu_custom_call.1} parent=1 // pred_fallthru
      _
    // Predicated region
    $region6: #{tpu_custom_call.1} parent=1 // pred_check
      _
    $region7: #{tpu_custom_call.1} parent=1 // pred_check_branch
      %25 = sbr.rel (0) target = $region9
    $region8: #{tpu_custom_call.1} parent=1 // pred_region
      %27 = vsyncadd [#allocation6], 0
      %s29 = sshll.u32 %s1, 4
      %s30 = int_to_ptr.hbm [resolvable:$true] %s29
      %s31 = sshll.u32 [#allocation5], 4
      %s32 = int_to_ptr.vmem [resolvable:$true] %s31
      %34 = dma.hbm_to_vmem [thread:$0]  %s30, 512, %s32, [#allocation6]
    $region9: #{tpu_custom_call.1} parent=1 // pred_fallthru
      _
    // Predicated region
    $region10: #{tpu_custom_call.1} parent=1 // pred_check
      _
    $region11: #{tpu_custom_call.1} parent=1 // pred_check_branch
      %36 = sbr.rel (0) target = $region13
    $region12: #{tpu_custom_call.1} parent=1 // pred_region
      %38 = vsyncadd [#allocation6], 0
      %s40 = sshll.u32 %s2, 4
      %s41 = int_to_ptr.hbm [resolvable:$true] %s40
      %s42 = sshll.u32 [#allocation7], 4
      %s43 = int_to_ptr.vmem [resolvable:$true] %s42
      %45 = dma.hbm_to_vmem [thread:$0]  %s41, 128, %s43, [#allocation6]
    $region13: #{tpu_custom_call.1} parent=1 // pred_fallthru
      _
    // Predicated region
    $region14: #{tpu_custom_call.1} parent=1 // pred_check
      _
    $region15: #{tpu_custom_call.1} parent=1 // pred_check_branch
      %47 = sbr.rel (0) target = $region17
    $region16: #{tpu_custom_call.1} parent=1 // pred_region
      %49 = vsyncadd [#allocation9], 0
      %s51 = sshll.u32 %s3, 4
      %s52 = int_to_ptr.hbm [resolvable:$true] %s51
      %s53 = sshll.u32 [#allocation8], 4
      %s54 = int_to_ptr.vmem [resolvable:$true] %s53
      %56 = dma.hbm_to_vmem [thread:$0]  %s52, 128, %s54, [#allocation9]
    $region17: #{tpu_custom_call.1} parent=1 // pred_fallthru
      _
    // Predicated region
    $region18: #{tpu_custom_call.1} parent=1 // pred_check
      _
    $region19: #{tpu_custom_call.1} parent=1 // pred_check_branch
      %58 = sbr.rel (0) target = $region21
    $region20: #{tpu_custom_call.1} parent=1 // pred_region
      %60 = dma.done [#allocation3], 512
    $region21: #{tpu_custom_call.1} parent=1 // pred_fallthru
      _
    // Predicated region
    $region22: #{tpu_custom_call.1} parent=1 // pred_check
      _
    $region23: #{tpu_custom_call.1} parent=1 // pred_check_branch
      %62 = sbr.rel (0) target = $region25
    $region24: #{tpu_custom_call.1} parent=1 // pred_region
      %64 = dma.done [#allocation6], 512
    $region25: #{tpu_custom_call.1} parent=1 // pred_fallthru
      _
    // Predicated region
    $region26: #{tpu_custom_call.1} parent=1 // pred_check
      _
    $region27: #{tpu_custom_call.1} parent=1 // pred_check_branch
      %66 = sbr.rel (0) target = $region29
    $region28: #{tpu_custom_call.1} parent=1 // pred_region
      %68 = dma.done [#allocation6], 128
    $region29: #{tpu_custom_call.1} parent=1 // pred_fallthru
      _
    // Predicated region
    $region30: #{tpu_custom_call.1} parent=1 // pred_check
      _
    $region31: #{tpu_custom_call.1} parent=1 // pred_check_branch
      %70 = sbr.rel (0) target = $region33
    $region32: #{tpu_custom_call.1} parent=1 // pred_region
      %72 = dma.done [#allocation9], 128
    $region33: #{tpu_custom_call.1} parent=1 // pred_fallthru
      _
    %v73 = vld [vmem:[#allocation2] sm:$0xff]
    %v74 = vld [vmem:[#allocation2 + $0x8] sm:$0xff]
    %v75 = vld [vmem:[#allocation2 + $0x10] sm:$0xff]
    %v76 = vld [vmem:[#allocation2 + $0x18] sm:$0xff]
    %77 = vst [vmem:[#allocation10] sm:$0xff] %v73
    %78 = vst [vmem:[#allocation10 + $0x8] sm:$0xff] %v74
    %79 = vst [vmem:[#allocation10 + $0x10] sm:$0xff] %v75
    %80 = vst [vmem:[#allocation10 + $0x18] sm:$0xff] %v76
    %v81 = vld [vmem:[#allocation5] sm:$0xff]
    %v82 = vld [vmem:[#allocation5 + $0x8] sm:$0xff]
    %v83 = vld [vmem:[#allocation5 + $0x10] sm:$0xff]
    %v84 = vld [vmem:[#allocation5 + $0x18] sm:$0xff]
    %85 = vst [vmem:[#allocation10 + $0x20] sm:$0xff] %v81
    %86 = vst [vmem:[#allocation10 + $0x28] sm:$0xff] %v82
    %87 = vst [vmem:[#allocation10 + $0x30] sm:$0xff] %v83
    %88 = vst [vmem:[#allocation10 + $0x38] sm:$0xff] %v84
    %v89 = vld [vmem:[#allocation7] sm:$0xff]
    %vm90 = vcmask 261120
    %91 = vst.msk [vmem:[#allocation10 + $0x40] sm:$0xff] %vm90, %v89
    %v92 = vld [vmem:[#allocation8] sm:$0xff]
    %94 = vrot.lane.b32.xlu0 %v92, 32
    %v95 = vpop.permute.xlu0 %94
    %vm97 = vcmask 392448
    %98 = vst.msk [vmem:[#allocation10 + $0x40] sm:$0xff] %vm97, %v95
    // Predicated region
    $region34: #{tpu_custom_call.1} parent=1 // pred_check
      _
    $region35: #{tpu_custom_call.1} parent=1 // pred_check_branch
      %100 = sbr.rel (0) target = $region37
    $region36: #{tpu_custom_call.1} parent=1 // pred_region
      %102 = vsyncadd [#allocation4], 0
      %s104 = sshll.u32 [#allocation10], 4
      %s105 = int_to_ptr.vmem [resolvable:$true] %s104
      %s106 = sshll.u32 %s4, 4
      %s107 = int_to_ptr.hbm [resolvable:$true] %s106
      %109 = dma.vmem_to_hbm [thread:$0]  %s105, 1152, %s107, [#allocation4]
    $region37: #{tpu_custom_call.1} parent=1 // pred_fallthru
      _
    // Predicated region
    $region38: #{tpu_custom_call.1} parent=1 // pred_check
      _
    $region39: #{tpu_custom_call.1} parent=1 // pred_check_branch
      %111 = sbr.rel (0) target = $region41
    $region40: #{tpu_custom_call.1} parent=1 // pred_region
      %113 = dma.done [#allocation4], 1152
    $region41: #{tpu_custom_call.1} parent=1 // pred_fallthru
      _
    %114 = vsyncpa [#allocation3], 1
    %115 = vsyncpa [#allocation6], 1
    %116 = vsyncpa [#allocation9], 1
    %117 = vsyncpa [#allocation4], 1

</llo_original>
